<compile_context>
chip_gen: v7x
topology: tpu7x:2x2x1
jax: 0.10.0
libtpu: 0.0.40
codegen_flags: <defaults>
</compile_context>

<pallas_src>
import jax
import jax.numpy as jnp
from jax.experimental import pallas as pl
from jax.experimental.pallas import tpu as pltpu


def _scale2d_kernel(par_ref, x_ref, o_ref):
    # par_ref: (1, C_blk, 1) VMEM; x_ref/o_ref: (N_blk, C_blk, HW_blk) VMEM.
    # Broadcast multiply along batch and lane (HW) axes.
    o_ref[...] = x_ref[...] * par_ref[...]


def scale_2d(x, par, *, target_tile_bytes=1 << 20, max_lane_blk=2048):
    """x: (N, C, H, W), par: (C,) -> (N, C, H, W); computes x * par[None,:,None,None]."""
    N, C, H, W = x.shape
    HW = H * W

    # Lane-dense view: last dim maps to the 128-lane axis.
    x3 = x.reshape(N, C, HW)
    par3 = par.reshape(1, C, 1)

    itemsize = jnp.dtype(x.dtype).itemsize
    elems_budget = max(1, target_tile_bytes // itemsize)

    # Lane (last) dim: full HW when it fits (always a legal block), otherwise a
    # 128-multiple chunk; ragged last block is handled by Pallas padding/masking.
    if HW <= max_lane_blk:
        hw_blk = HW
    else:
        hw_blk = max_lane_blk  # multiple of 128

    # Channel (second-to-last) dim: full C, or a multiple of 8 within budget.
    c_budget = max(1, elems_budget // hw_blk)
    if c_budget >= C:
        c_blk = C
    else:
        c_blk = min(max(8, (c_budget // 8) * 8), C)

    # Batch dim: soak up the remaining tile budget (no layout constraint here).
    n_budget = max(1, elems_budget // (c_blk * hw_blk))
    n_blk = min(N, n_budget)

    grid = (pl.cdiv(N, n_blk), pl.cdiv(C, c_blk), pl.cdiv(HW, hw_blk))

    out3 = pl.pallas_call(
        _scale2d_kernel,
        out_shape=jax.ShapeDtypeStruct((N, C, HW), x.dtype),
        grid=grid,
        in_specs=[
            # per-channel scales, blocked along the channel grid axis
            pl.BlockSpec((1, c_blk, 1), lambda n, c, h: (0, c, 0)),
            # activation tile
            pl.BlockSpec((n_blk, c_blk, hw_blk), lambda n, c, h: (n, c, h)),
        ],
        out_specs=pl.BlockSpec((n_blk, c_blk, hw_blk), lambda n, c, h: (n, c, h)),
        compiler_params=pltpu.CompilerParams(
            dimension_semantics=("parallel", "parallel", "parallel")
        ),
    )(par3, x3)

    return out3.reshape(N, C, H, W)


if __name__ == "__main__":
    # Module __init__: par = Parameter(randn(out_ch)) then constant_(par, 0.001)
    # -> deterministically all entries equal init_val.
    N, C, H, W = 2, 4, 16, 16
    init_val = 0.001
    par = jnp.full((C,), init_val, dtype=jnp.float32)

    key = jax.random.PRNGKey(0)
    x = jax.random.normal(key, (N, C, H, W), dtype=jnp.float32)

    out = scale_2d(x, par)
    jax.block_until_ready(out)

    ref = x * par[None, :, None, None]
    assert out.shape == (N, C, H, W)
    assert jnp.allclose(out, ref, atol=1e-6, rtol=1e-6)

    # Second check: exercises multi-step grid + ragged trailing lane block.
    N2, C2, H2, W2 = 3, 20, 64, 48
    key2 = jax.random.PRNGKey(0)
    par2 = jax.random.normal(jax.random.fold_in(key2, 1), (C2,), dtype=jnp.float32)
    x2 = jax.random.normal(jax.random.fold_in(key2, 2), (N2, C2, H2, W2), dtype=jnp.float32)
    out2 = scale_2d(x2, par2)
    jax.block_until_ready(out2)
    ref2 = x2 * par2[None, :, None, None]
    assert jnp.allclose(out2, ref2, atol=1e-6, rtol=1e-6)

    print("KERNEL_OK")
</pallas_src>

<mosaic_0001>
module attributes {stable_mosaic.version = 11 : i64} {
  func.func @_scale2d_kernel(%arg0: i32, %arg1: i32, %arg2: i32, %arg3: memref<1x4x1xf32, #tpu.memory_space<vmem>>, %arg4: memref<2x4x256xf32, #tpu.memory_space<vmem>>, %arg5: memref<2x4x256xf32, #tpu.memory_space<vmem>>) attributes {dimension_semantics = [#tpu.dimension_semantics<parallel>, #tpu.dimension_semantics<parallel>, #tpu.dimension_semantics<parallel>], iteration_bounds = array<i64: 1, 1, 1>, scalar_prefetch = 0 : i64, scratch_operands = 0 : i64, tpu.core_type = #tpu.core_type<tc>, window_params = [{transform_indices = @transform_0, window_bounds = array<i64: 1, 4, 1>}, {transform_indices = @transform_1, window_bounds = array<i64: 2, 4, 256>}, {transform_indices = @transform_2, window_bounds = array<i64: 2, 4, 256>}]} {
    %c0 = arith.constant 0 : index
    %c0_0 = arith.constant 0 : index
    %c0_1 = arith.constant 0 : index
    %0 = vector.load %arg4[%c0, %c0_0, %c0_1] : memref<2x4x256xf32, #tpu.memory_space<vmem>>, vector<2x4x256xf32>
    %c0_2 = arith.constant 0 : index
    %c0_3 = arith.constant 0 : index
    %c0_4 = arith.constant 0 : index
    %1 = vector.load %arg3[%c0_2, %c0_3, %c0_4] : memref<1x4x1xf32, #tpu.memory_space<vmem>>, vector<1x4x1xf32>
    %2 = vector.broadcast %1 : vector<1x4x1xf32> to vector<2x4x256xf32>
    %3 = arith.mulf %0, %2 : vector<2x4x256xf32>
    %c0_5 = arith.constant 0 : index
    %c0_6 = arith.constant 0 : index
    %c0_7 = arith.constant 0 : index
    %4 = vector.load %arg5[%c0_5, %c0_6, %c0_7] : memref<2x4x256xf32, #tpu.memory_space<vmem>>, vector<2x4x256xf32>
    tpu.vector_store %arg5[%c0_5, %c0_6, %c0_7], %3 {strides = array<i32>} : memref<2x4x256xf32, #tpu.memory_space<vmem>>, vector<2x4x256xf32>,
    return
  }
  func.func @transform_0(%arg0: i32, %arg1: i32, %arg2: i32) -> (i32, i32, i32) {
    %c0_i32 = arith.constant 0 : i32
    %c0_i32_0 = arith.constant 0 : i32
    %c0_i32_1 = arith.constant 0 : i32
    return %c0_i32, %arg1, %c0_i32_0 : i32, i32, i32
  }
  func.func @transform_1(%arg0: i32, %arg1: i32, %arg2: i32) -> (i32, i32, i32) {
    %c0_i32 = arith.constant 0 : i32
    return %arg0, %arg1, %arg2 : i32, i32, i32
  }
  func.func @transform_2(%arg0: i32, %arg1: i32, %arg2: i32) -> (i32, i32, i32) {
    %c0_i32 = arith.constant 0 : i32
    return %arg0, %arg1, %arg2 : i32, i32, i32
  }
}

</mosaic_0001>

<llo_original>
// kernel: tpu_custom_call.1
$region0: #{tpu_custom_call.1}
  #allocation0 [shape = 'u32[]', space=smem, size = 0x4, offset = 0x4, fixed_abs, tag = 'smem constant byte address 0x4 - core index']
  #allocation1 [shape = 'u32[144,128]{1,0:T(1,128)}', space=vmem, size = 0x12000, scoped, tag = 'internal scratch']
  %s0 = inlined_call_operand.vmem [shape: f32[1,4,1], index: 0, kind: input, shape index: {}]
  %s1 = inlined_call_operand.hbm [shape: f32[2,4,256], index: 1, kind: input, shape index: {}]
  %s2 = inlined_call_operand.hbm [shape: f32[2,4,256], index: 2, kind: output, shape index: {}]
  %s3 = sld [smem:[#allocation0]]
  $region22: #{tpu_custom_call.1} parent=0
    _
  %s5 = ssub.s32 1, %s3
  %s6 = scalar_select 0, %s5, %s3
  $region1: #{tpu_custom_call.1} parent=0
    #allocation2 [shape = 'u8[8192]{0}', space=vmem, size = 0x2000, scoped, tag = 'input window, operand 1, single buffered']
    #allocation3 [shape = 's32[1]{0}', space=sflag, size = 0x4, scoped, tag = 'scoped memory for tpu_custom_call.1']
    #allocation4 [shape = 's32[1]{0}', space=sflag, size = 0x4, scoped, tag = 'scoped memory for tpu_custom_call.1']
    #allocation5 [shape = 'u8[8192]{0}', space=vmem, size = 0x2000, scoped, tag = 'output window, operand 0, single buffered']
    %7 = vsyncpa [#allocation3], 0
    %8 = vsyncpa [#allocation4], 0
    // Predicated region
    $region2: #{tpu_custom_call.1} parent=1 // pred_check
      _
    $region3: #{tpu_custom_call.1} parent=1 // pred_check_branch
      %10 = sbr.rel (0) target = $region5
    $region4: #{tpu_custom_call.1} parent=1 // pred_region
      _
    $region5: #{tpu_custom_call.1} parent=1 // pred_fallthru
      _
    // Predicated region
    $region6: #{tpu_custom_call.1} parent=1 // pred_check
      _
    $region7: #{tpu_custom_call.1} parent=1 // pred_check_branch
      %12 = sbr.rel (0) target = $region9
    $region8: #{tpu_custom_call.1} parent=1 // pred_region
      %s14 = ssub.s32 256, 256
      %15 = vsyncadd [#allocation3], %s14
      %s16 = sshll.u32 [#allocation2], 4
      %s17 = int_to_ptr.vmem [resolvable:$true] %s16
      %22 = dma.hbm_to_vmem [thread:$0]  %s1, 256, %s17, [#allocation3], 128, 128, 8
    $region9: #{tpu_custom_call.1} parent=1 // pred_fallthru
      _
    // Predicated region
    $region10: #{tpu_custom_call.1} parent=1 // pred_check
      _
    $region11: #{tpu_custom_call.1} parent=1 // pred_check_branch
      %24 = sbr.rel (0) target = $region13
    $region12: #{tpu_custom_call.1} parent=1 // pred_region
      %25 = dma.done [#allocation3], 256
    $region13: #{tpu_custom_call.1} parent=1 // pred_fallthru
      _
    %v26 = vld [vmem:[#allocation2] sm:$0xff]
    %v27 = vld [vmem:[#allocation2 + $0x8] sm:$0xff]
    %v28 = vld [vmem:[%s0] sm:$0xf]
    %30 = vset.pattern.permute.xlu0 0
    %31 = vperm.xlu0 %30, %v28
    %v32 = vpop.permute.xlu0 %31
    %v34 = vunpack.c.l.s4 839922192
    %v35 = vunpack.c.0.s8 %v34
    %v36 = vlaneseq
    %v37 = vshrl.u32 %v36, 7
    %v38 = vsub.s32 %v35, %v37
    %v39 = vrot.slane %v32, %v38
    %v41 = vmul.f32 %v26, %v39
    %v42 = vmul.f32 %v27, %v39
    %43 = vst [vmem:[#allocation5] sm:$0xff] %v41
    %44 = vst [vmem:[#allocation5 + $0x8] sm:$0xff] %v42
    // Predicated region
    $region14: #{tpu_custom_call.1} parent=1 // pred_check
      _
    $region15: #{tpu_custom_call.1} parent=1 // pred_check_branch
      %46 = sbr.rel (0) target = $region17
    $region16: #{tpu_custom_call.1} parent=1 // pred_region
      %s48 = ssub.s32 256, 256
      %49 = vsyncadd [#allocation4], %s48
      %s50 = sshll.u32 [#allocation5], 4
      %s51 = int_to_ptr.vmem [resolvable:$true] %s50
      %56 = dma.vmem_to_hbm [thread:$0]  %s51, 256, %s2, [#allocation4], 128, 128, 8
    $region17: #{tpu_custom_call.1} parent=1 // pred_fallthru
      _
    // Predicated region
    $region18: #{tpu_custom_call.1} parent=1 // pred_check
      _
    $region19: #{tpu_custom_call.1} parent=1 // pred_check_branch
      %58 = sbr.rel (0) target = $region21
    $region20: #{tpu_custom_call.1} parent=1 // pred_region
      %59 = dma.done [#allocation4], 256
    $region21: #{tpu_custom_call.1} parent=1 // pred_fallthru
      _
    %60 = vsyncpa [#allocation3], 1
    %61 = vsyncpa [#allocation4], 1

</llo_original>
